<compile_context>
chip_gen: v6e
topology: v6e:2x2x1
jax: 0.10.0
libtpu: 0.0.40
codegen_flags: <defaults>
</compile_context>

<pallas_src>
import functools

import jax
import jax.numpy as jnp
from jax.experimental import pallas as pl
from jax.experimental.pallas import tpu as pltpu


def _sxe_kernel(tile_ids_ref, nlive_ref, logits_ref, targets_ref, mask_ref,
                out_ref, acc_ref, *, num_p, tile_r):
    """Grid = (P, tiles_per_p). Axis 0 is parallel (per-core partial sums),
    axis 1 is the sequential reduction over compacted live row-tiles."""
    p = pl.program_id(0)
    k = pl.program_id(1)

    @pl.when(k == 0)
    def _():
        acc_ref[...] = jnp.zeros_like(acc_ref)

    # Only genuinely live tiles contribute; trailing clamped (dead) iterations
    # are skipped entirely (their block index repeats -> no re-DMA either).
    @pl.when(k * num_p + p < nlive_ref[0])
    def _():
        x = (targets_ref[...].astype(jnp.float32) *
             logits_ref[...].astype(jnp.float32))
        # sigmoid via tanh: tanh + log = 2 EUP ops/element (vs exp+recip+log).
        sig = 0.5 * jnp.tanh(0.5 * x) + 0.5
        nll = -jnp.log(sig + 1e-12)
        # (tile_r, 1) row mask; zero for post-EOS rows AND for the padded /
        # out-of-bounds tail of a ragged last tile.
        keep = mask_ref[...] > 0.5
        # select (NOT multiply): OOB block contents are unspecified, NaN*0=NaN.
        contrib = jnp.where(keep, nll, 0.0)
        # Row-axis partial reduction into a small (8, V) accumulator:
        # pure VPU adds, no big accumulator load/store per step.
        v = contrib.shape[-1]
        acc_ref[...] += contrib.reshape(tile_r // 8, 8, v).sum(axis=0)

    @pl.when(k == pl.num_programs(1) - 1)
    def _():
        # Single cross-lane/sublane reduction per output block; lane-dense write.
        out_ref[...] = jnp.zeros_like(out_ref) + jnp.sum(acc_ref[...])


def _pick_tile_r(rows, V, l_size, t_size, vmem_budget):
    """Largest multiple-of-8 row tile whose live VMEM footprint fits the budget.

    Per row of tile:
      inputs (double-buffered, native dtypes): 2 * V * (l_size + t_size)
      mask block (double-buffered, lane-padded to 128 lanes of f32): 2 * 128 * 4
    Fixed: (8, V) f32 accumulator + double-buffered (1,8,128) output + slack.
    """
    fixed = 8 * V * 4 + 2 * 8 * 128 * 4 + (256 << 10)
    per_row = 2 * V * (l_size + t_size) + 2 * 128 * 4
    t = max(8, (max(vmem_budget - fixed, 8 * per_row)) // per_row)
    t = min(t, pl.cdiv(rows, 8) * 8)   # no point exceeding (8-rounded) row count
    t = max(8, (t // 8) * 8)
    return int(t)


def sigmoid_cross_entropy_loss(logits, targets, seq, eos_id):
    B, T, V = logits.shape
    rows = B * T

    # ---- mask construction (cheap [B, T] JAX glue, mirrors torch forward) ----
    before_eos = jnp.cumsum((seq == eos_id).astype(jnp.int32), axis=-1) == 0
    mask = jnp.concatenate(
        [jnp.ones((B, 1), dtype=bool), before_eos[:, :-1]], axis=1)
    mask_flat = mask.reshape(rows)

    # Native dtypes streamed from HBM; cast happens inside the kernel.
    logits2d = logits.reshape(rows, V)
    targets2d = targets.reshape(rows, V)

    # ---- generation-aware VMEM budget ----
    try:
        vmem_cap = int(pltpu.get_tpu_info().vmem_capacity_bytes)
    except Exception:
        vmem_cap = 64 * 1024 * 1024          # conservative (v7x-sized) fallback
    vmem_limit = min(vmem_cap * 3 // 4, 96 * 1024 * 1024)
    vmem_budget = vmem_limit * 3 // 4

    l_size = jnp.dtype(logits2d.dtype).itemsize
    t_size = jnp.dtype(targets2d.dtype).itemsize
    tile_r = _pick_tile_r(rows, V, l_size, t_size, vmem_budget)

    num_tiles = int(pl.cdiv(rows, tile_r))
    # Parallel outer axis for v7x megacore; with no input padding and clamped
    # trailing iterations this is near-free on single-TensorCore chips.
    P = 2 if num_tiles >= 2 else 1
    tiles_per_p = int(pl.cdiv(num_tiles, P))

    # Pad ONLY the tiny row mask (rows * 4 bytes); logits/targets are NOT padded.
    rows_m = num_tiles * tile_r
    mask_pad = jnp.zeros((rows_m,), dtype=jnp.float32).at[:rows].set(
        mask_flat.astype(jnp.float32))
    mask2d = mask_pad.reshape(rows_m, 1)

    # ---- compacted live-tile schedule: skip fully-masked (post-EOS) tiles ----
    live = mask_pad.reshape(num_tiles, tile_r).max(axis=1) > 0.0
    tile_ids = jnp.argsort(jnp.where(live, 0, 1).astype(jnp.int32),
                           stable=True).astype(jnp.int32)      # live tiles first
    nlive = jnp.sum(live).astype(jnp.int32).reshape(1)          # >= 1 always

    def inp_map(p, k, tids, nl):
        # Round-robin live tiles over the parallel axis; clamp dead iterations
        # to the last live tile (consecutive repeats -> no re-DMA).
        linear = jnp.minimum(k * P + p, nl[0] - 1)
        return (tids[linear], 0)

    kernel = functools.partial(_sxe_kernel, num_p=P, tile_r=tile_r)

    partials = pl.pallas_call(
        kernel,
        out_shape=jax.ShapeDtypeStruct((P, 8, 128), jnp.float32),
        grid_spec=pltpu.PrefetchScalarGridSpec(
            num_scalar_prefetch=2,
            grid=(P, tiles_per_p),
            in_specs=[
                pl.BlockSpec((tile_r, V), inp_map),
                pl.BlockSpec((tile_r, V), inp_map),
                pl.BlockSpec((tile_r, 1), inp_map),
            ],
            out_specs=pl.BlockSpec((1, 8, 128), lambda p, k, tids, nl: (p, 0, 0)),
            scratch_shapes=[pltpu.VMEM((8, V), jnp.float32)],
        ),
        compiler_params=pltpu.CompilerParams(
            dimension_semantics=("parallel", "arbitrary"),
            vmem_limit_bytes=int(vmem_limit)),
    )(tile_ids, nlive, logits2d, targets2d, mask2d)

    masked_sum = jnp.sum(partials[:, 0, 0])
    count = jnp.sum(mask_flat.astype(jnp.float32))      # #selected rows (>= B)
    loss = masked_sum / (count * jnp.float32(V))         # mean over selected elems
    return loss


def _reference_loss(logits, targets, seq, eos_id):
    # Pure-JAX reference mirroring the PyTorch forward.
    B, T, V = logits.shape
    before_eos = jnp.cumsum((seq == eos_id).astype(jnp.int32), axis=-1) == 0
    mask = jnp.concatenate(
        [jnp.ones((B, 1), dtype=bool), before_eos[:, :-1]], axis=1)
    x = targets.astype(jnp.float32) * logits.astype(jnp.float32)
    nll = -jnp.log(jax.nn.sigmoid(x) + 1e-12)
    m = mask.astype(jnp.float32)[..., None]
    return jnp.sum(nll * m) / (jnp.sum(m) * V)


if __name__ == "__main__":
    # Module has no trainable weights; the only "parameter" is eos_id.
    EOS_ID = 0
    B, T, V = 2, 8, 32   # batch=2, seq=8, vocab/hidden=32

    key = jax.random.PRNGKey(0)
    k1, k2, k3 = jax.random.split(key, 3)
    logits = jax.random.normal(k1, (B, T, V), dtype=jnp.float32)
    # binary targets used by sigmoid XE (here {0,1} floats)
    targets = jax.random.bernoulli(k2, 0.5, (B, T, V)).astype(jnp.float32)
    # token ids in [0, 10); eos_id=0 appears with reasonable probability
    seq = jax.random.randint(k3, (B, T), 0, 10, dtype=jnp.int32)

    loss = jax.block_until_ready(
        sigmoid_cross_entropy_loss(logits, targets, seq, EOS_ID))
    ref = jax.block_until_ready(_reference_loss(logits, targets, seq, EOS_ID))

    assert jnp.abs(loss - ref) < 2e-5, (loss, ref)
    print("KERNEL_OK")
</pallas_src>

<mosaic_0001>
module attributes {stable_mosaic.version = 11 : i64} {
  func.func @_sxe_kernel(%arg0: i32, %arg1: i32, %arg2: memref<1xi32, #tpu.memory_space<smem>>, %arg3: memref<1xi32, #tpu.memory_space<smem>>, %arg4: memref<16x32xf32, #tpu.memory_space<vmem>>, %arg5: memref<16x32xf32, #tpu.memory_space<vmem>>, %arg6: memref<16x1xf32, #tpu.memory_space<vmem>>, %arg7: memref<1x8x128xf32, #tpu.memory_space<vmem>>, %arg8: memref<8x32xf32, #tpu.memory_space<vmem>>) attributes {dimension_semantics = [#tpu.dimension_semantics<parallel>, #tpu.dimension_semantics<arbitrary>], iteration_bounds = array<i64: 1, 1>, scalar_prefetch = 2 : i64, scratch_operands = 1 : i64, tpu.core_type = #tpu.core_type<tc>, window_params = [{transform_indices = @transform_0, window_bounds = array<i64: 16, 32>}, {transform_indices = @transform_1, window_bounds = array<i64: 16, 32>}, {transform_indices = @transform_2, window_bounds = array<i64: 16, 1>}, {transform_indices = @transform_3, window_bounds = array<i64: 1, 8, 128>}]} {
    %c0_i32 = arith.constant 0 : i32
    %0 = arith.cmpi eq, %arg1, %c0_i32 : i32
    %1 = arith.extui %0 : i1 to i32
    %c0_i32_0 = arith.constant 0 : i32
    %2 = arith.cmpi ne, %1, %c0_i32_0 : i32
    scf.if %2 {
      %cst = arith.constant 0.000000e+00 : f32
      %12 = vector.broadcast %cst : f32 to vector<8x32xf32>
      %c0_4 = arith.constant 0 : index
      %c0_5 = arith.constant 0 : index
      %13 = vector.load %arg8[%c0_4, %c0_5] : memref<8x32xf32, #tpu.memory_space<vmem>>, vector<8x32xf32>
      tpu.vector_store %arg8[%c0_4, %c0_5], %12 {strides = array<i32>} : memref<8x32xf32, #tpu.memory_space<vmem>>, vector<8x32xf32>,
    } else {
    }
    %c1_i32 = arith.constant 1 : i32
    %3 = arith.muli %arg1, %c1_i32 : i32
    %4 = arith.addi %3, %arg0 : i32
    %c0 = arith.constant 0 : index
    %5 = memref.load %arg3[%c0] : memref<1xi32, #tpu.memory_space<smem>>
    %6 = arith.cmpi slt, %4, %5 : i32
    %7 = arith.extui %6 : i1 to i32
    %c0_i32_1 = arith.constant 0 : i32
    %8 = arith.cmpi ne, %7, %c0_i32_1 : i32
    scf.if %8 {
      %c0_4 = arith.constant 0 : index
      %c0_5 = arith.constant 0 : index
      %12 = vector.load %arg5[%c0_4, %c0_5] : memref<16x32xf32, #tpu.memory_space<vmem>>, vector<16x32xf32>
      %c0_6 = arith.constant 0 : index
      %c0_7 = arith.constant 0 : index
      %13 = vector.load %arg4[%c0_6, %c0_7] : memref<16x32xf32, #tpu.memory_space<vmem>>, vector<16x32xf32>
      %14 = arith.mulf %12, %13 : vector<16x32xf32>
      %cst = arith.constant 5.000000e-01 : f32
      %15 = vector.broadcast %cst : f32 to vector<16x32xf32>
      %16 = arith.mulf %15, %14 : vector<16x32xf32>
      %17 = math.tanh %16 : vector<16x32xf32>
      %cst_8 = arith.constant 5.000000e-01 : f32
      %18 = vector.broadcast %cst_8 : f32 to vector<16x32xf32>
      %19 = arith.mulf %18, %17 : vector<16x32xf32>
      %cst_9 = arith.constant 5.000000e-01 : f32
      %20 = vector.broadcast %cst_9 : f32 to vector<16x32xf32>
      %21 = arith.addf %19, %20 : vector<16x32xf32>
      %cst_10 = arith.constant 9.99999996E-13 : f32
      %22 = vector.broadcast %cst_10 : f32 to vector<16x32xf32>
      %23 = arith.addf %21, %22 : vector<16x32xf32>
      %24 = math.log %23 : vector<16x32xf32>
      %cst_11 = arith.constant 0.000000e+00 : f32
      %25 = vector.broadcast %cst_11 : f32 to vector<16x32xf32>
      %26 = arith.subf %25, %24 : vector<16x32xf32>
      %c0_12 = arith.constant 0 : index
      %c0_13 = arith.constant 0 : index
      %27 = vector.load %arg6[%c0_12, %c0_13] : memref<16x1xf32, #tpu.memory_space<vmem>>, vector<16x1xf32>
      %cst_14 = arith.constant 5.000000e-01 : f32
      %28 = vector.broadcast %cst_14 : f32 to vector<16x1xf32>
      %29 = arith.cmpf ogt, %27, %28 : vector<16x1xf32>
      %cst_15 = arith.constant 0.000000e+00 : f32
      %30 = vector.shape_cast %29 : vector<16x1xi1> to vector<16x1xi1>
      %31 = vector.broadcast %30 : vector<16x1xi1> to vector<16x32xi1>
      %32 = vector.broadcast %cst_15 : f32 to vector<16x32xf32>
      %33 = arith.select %31, %26, %32 : vector<16x32xi1>, vector<16x32xf32>
      %c0_16 = arith.constant 0 : index
      %c0_17 = arith.constant 0 : index
      %34 = vector.load %arg8[%c0_16, %c0_17] : memref<8x32xf32, #tpu.memory_space<vmem>>, vector<8x32xf32>
      %35 = vector.shape_cast %33 : vector<16x32xf32> to vector<2x8x32xf32>
      %cst_18 = arith.constant dense<0.000000e+00> : vector<8x32xf32>
      %36 = vector.multi_reduction <add>, %35, %cst_18 [0] : vector<2x8x32xf32> to vector<8x32xf32>
      %37 = arith.addf %34, %36 : vector<8x32xf32>
      %c0_19 = arith.constant 0 : index
      %c0_20 = arith.constant 0 : index
      %38 = vector.load %arg8[%c0_19, %c0_20] : memref<8x32xf32, #tpu.memory_space<vmem>>, vector<8x32xf32>
      tpu.vector_store %arg8[%c0_19, %c0_20], %37 {strides = array<i32>} : memref<8x32xf32, #tpu.memory_space<vmem>>, vector<8x32xf32>,
    } else {
    }
    %c0_i32_2 = arith.constant 0 : i32
    %9 = arith.cmpi eq, %arg1, %c0_i32_2 : i32
    %10 = arith.extui %9 : i1 to i32
    %c0_i32_3 = arith.constant 0 : i32
    %11 = arith.cmpi ne, %10, %c0_i32_3 : i32
    scf.if %11 {
      %cst = arith.constant 0.000000e+00 : f32
      %12 = vector.broadcast %cst : f32 to vector<1x8x128xf32>
      %c0_4 = arith.constant 0 : index
      %c0_5 = arith.constant 0 : index
      %13 = vector.load %arg8[%c0_4, %c0_5] : memref<8x32xf32, #tpu.memory_space<vmem>>, vector<8x32xf32>
      %14 = vector.shape_cast %13 : vector<8x32xf32> to vector<1x8x32xf32>
      %cst_6 = arith.constant dense<0.000000e+00> : vector<1xf32>
      %15 = vector.multi_reduction <add>, %14, %cst_6 [1, 2] : vector<1x8x32xf32> to vector<1xf32>
      %16 = vector.shape_cast %15 : vector<1xf32> to vector<1x1x1xf32>
      %17 = vector.extract %16[0, 0, 0] : f32 from vector<1x1x1xf32>
      %18 = vector.broadcast %17 : f32 to vector<1x8x128xf32>
      %19 = arith.addf %12, %18 : vector<1x8x128xf32>
      %c0_7 = arith.constant 0 : index
      %c0_8 = arith.constant 0 : index
      %c0_9 = arith.constant 0 : index
      %20 = vector.load %arg7[%c0_7, %c0_8, %c0_9] : memref<1x8x128xf32, #tpu.memory_space<vmem>>, vector<1x8x128xf32>
      tpu.vector_store %arg7[%c0_7, %c0_8, %c0_9], %19 {strides = array<i32>} : memref<1x8x128xf32, #tpu.memory_space<vmem>>, vector<1x8x128xf32>,
    } else {
    }
    return
  }
  func.func @transform_0(%arg0: i32, %arg1: i32, %arg2: memref<1xi32, #tpu.memory_space<smem>>, %arg3: memref<1xi32, #tpu.memory_space<smem>>) -> (i32, i32) {
    %c1_i32 = arith.constant 1 : i32
    %0 = arith.muli %arg1, %c1_i32 : i32
    %1 = arith.addi %0, %arg0 : i32
    %c0 = arith.constant 0 : index
    %2 = memref.load %arg3[%c0] : memref<1xi32, #tpu.memory_space<smem>>
    %c1_i32_0 = arith.constant 1 : i32
    %3 = arith.subi %2, %c1_i32_0 : i32
    %4 = arith.minsi %1, %3 : i32
    %5 = arith.index_cast %4 : i32 to index
    %6 = memref.load %arg2[%5] : memref<1xi32, #tpu.memory_space<smem>>
    %c0_i32 = arith.constant 0 : i32
    %c0_i32_1 = arith.constant 0 : i32
    return %6, %c0_i32 : i32, i32
  }
  func.func @transform_1(%arg0: i32, %arg1: i32, %arg2: memref<1xi32, #tpu.memory_space<smem>>, %arg3: memref<1xi32, #tpu.memory_space<smem>>) -> (i32, i32) {
    %c1_i32 = arith.constant 1 : i32
    %0 = arith.muli %arg1, %c1_i32 : i32
    %1 = arith.addi %0, %arg0 : i32
    %c0 = arith.constant 0 : index
    %2 = memref.load %arg3[%c0] : memref<1xi32, #tpu.memory_space<smem>>
    %c1_i32_0 = arith.constant 1 : i32
    %3 = arith.subi %2, %c1_i32_0 : i32
    %4 = arith.minsi %1, %3 : i32
    %5 = arith.index_cast %4 : i32 to index
    %6 = memref.load %arg2[%5] : memref<1xi32, #tpu.memory_space<smem>>
    %c0_i32 = arith.constant 0 : i32
    %c0_i32_1 = arith.constant 0 : i32
    return %6, %c0_i32 : i32, i32
  }
  func.func @transform_2(%arg0: i32, %arg1: i32, %arg2: memref<1xi32, #tpu.memory_space<smem>>, %arg3: memref<1xi32, #tpu.memory_space<smem>>) -> (i32, i32) {
    %c1_i32 = arith.constant 1 : i32
    %0 = arith.muli %arg1, %c1_i32 : i32
    %1 = arith.addi %0, %arg0 : i32
    %c0 = arith.constant 0 : index
    %2 = memref.load %arg3[%c0] : memref<1xi32, #tpu.memory_space<smem>>
    %c1_i32_0 = arith.constant 1 : i32
    %3 = arith.subi %2, %c1_i32_0 : i32
    %4 = arith.minsi %1, %3 : i32
    %5 = arith.index_cast %4 : i32 to index
    %6 = memref.load %arg2[%5] : memref<1xi32, #tpu.memory_space<smem>>
    %c0_i32 = arith.constant 0 : i32
    %c0_i32_1 = arith.constant 0 : i32
    return %6, %c0_i32 : i32, i32
  }
  func.func @transform_3(%arg0: i32, %arg1: i32, %arg2: memref<1xi32, #tpu.memory_space<smem>>, %arg3: memref<1xi32, #tpu.memory_space<smem>>) -> (i32, i32, i32) {
    %c0_i32 = arith.constant 0 : i32
    %c0_i32_0 = arith.constant 0 : i32
    %c0_i32_1 = arith.constant 0 : i32
    return %arg0, %c0_i32, %c0_i32_0 : i32, i32, i32
  }
}

</mosaic_0001>

<llo_original>
// kernel: tpu_custom_call.1
$region0: #{tpu_custom_call.1}
  #allocation0 [shape = 'u32[]', space=smem, size = 0x4, offset = 0x4, fixed_abs, tag = 'smem constant byte address 0x4 - core index']
  #allocation1 [shape = 'u32[144,128]{1,0:T(1,128)}', space=vmem, size = 0x12000, scoped, tag = 'internal scratch']
  #allocation2 [shape = 'f32[8,32]{1,0:T(8,128)}', space=vmem, size = 0x1000, scoped, tag = 'scratch operand']
  #allocation3 [shape = 's32[1]{0}', space=sflag, size = 0x4, scoped, tag = 'scoped memory for tpu_custom_call.1']
  #allocation4 [shape = 's32[1]{0:T(128)S(6)}', space=smem, size = 0x200, scoped, tag = 'prefetched SMEM operand 0']
  #allocation5 [shape = 's32[1]{0:T(128)S(6)}', space=smem, size = 0x200, scoped, tag = 'prefetched SMEM operand 1']
  %s0 = inlined_call_operand.<no memory space> [shape: s32[1], index: 0, kind: input, shape index: {}]
  %s1 = inlined_call_operand.<no memory space> [shape: s32[1], index: 1, kind: input, shape index: {}]
  %s2 = inlined_call_operand.vmem [shape: f32[16,32], index: 2, kind: input, shape index: {}]
  %s3 = inlined_call_operand.hbm [shape: f32[16,32], index: 3, kind: input, shape index: {}]
  %s4 = inlined_call_operand.vmem [shape: f32[16,1], index: 4, kind: input, shape index: {}]
  %s5 = inlined_call_operand.hbm [shape: f32[1,8,128], index: 5, kind: output, shape index: {}]
  %s6 = sld [smem:[#allocation0]]
  $region38: #{tpu_custom_call.1} parent=0
    _
  %s8 = ssub.s32 1, %s6
  %s9 = scalar_select 0, %s8, %s6
  %10 = sst [smem:[#allocation4]] %s0
  %11 = sst [smem:[#allocation5]] %s1
  $region1: #{tpu_custom_call.1} parent=0
    #allocation6 [shape = 'u8[8192]{0}', space=vmem, size = 0x2000, scoped, tag = 'input window, operand 3, single buffered']
    #allocation7 [shape = 's32[1]{0}', space=sflag, size = 0x4, scoped, tag = 'scoped memory for tpu_custom_call.1']
    #allocation8 [shape = 's32[1]{0}', space=sflag, size = 0x4, scoped, tag = 'scoped memory for tpu_custom_call.1']
    #allocation9 [shape = 'u8[4096]{0}', space=vmem, size = 0x1000, scoped, tag = 'output window, operand 0, single buffered']
    %12 = vsyncpa [#allocation7], 0
    %13 = vsyncpa [#allocation8], 0
    // Predicated region
    $region2: #{tpu_custom_call.1} parent=1 // pred_check
      _
    $region3: #{tpu_custom_call.1} parent=1 // pred_check_branch
      %15 = sbr.rel (0) target = $region5
    $region4: #{tpu_custom_call.1} parent=1 // pred_region
      %s16 = sadd.s32 0, 0
      %s17 = sld [smem:[#allocation5]]
      %s18 = ssub.s32 %s17, 1
      %p19 = scmp.lt.s32.totalorder %s16, %s18
      %s20 = scalar_select %p19, %s16, %s18
      %s21 = sld [smem:[#allocation4 + %s20]]
      %s22 = smul.u32 2, %s21
      %p23 = scmp.lt.s32.totalorder %s22, 1
      %s24 = scalar_select %p23, %s22, 1
      %s25 = smul.addr %s24, 8
      %s26 = scalar_lea.vmem %s2, %s25
      %s27 = sadd.s32 0, 0
      %s28 = sld [smem:[#allocation5]]
      %s29 = ssub.s32 %s28, 1
      %p30 = scmp.lt.s32.totalorder %s27, %s29
      %s31 = scalar_select %p30, %s27, %s29
      %s32 = sld [smem:[#allocation4 + %s31]]
      %s33 = smul.u32 2, %s32
    $region5: #{tpu_custom_call.1} parent=1 // pred_fallthru
      _
    // Predicated region
    $region6: #{tpu_custom_call.1} parent=1 // pred_check
      _
    $region7: #{tpu_custom_call.1} parent=1 // pred_check_branch
      %35 = sbr.rel (0) target = $region9
    $region8: #{tpu_custom_call.1} parent=1 // pred_region
      %s36 = sadd.s32 0, 0
      %s37 = sld [smem:[#allocation5]]
      %s38 = ssub.s32 %s37, 1
      %p39 = scmp.lt.s32.totalorder %s36, %s38
      %s40 = scalar_select %p39, %s36, %s38
      %s41 = sld [smem:[#allocation4 + %s40]]
      %s42 = smul.u32 2, %s41
      %s44 = ssub.s32 256, 256
      %45 = vsyncadd [#allocation7], %s44
      %s46 = smul.addr %s42, 128
      %s47 = scalar_lea.hbm %s3, %s46
      %s48 = sshll.u32 [#allocation6], 4
      %s49 = int_to_ptr.vmem [resolvable:$true] %s48
      %54 = dma.hbm_to_vmem [thread:$0]  %s47, 256, %s49, [#allocation7], 128, 128, 8
    $region9: #{tpu_custom_call.1} parent=1 // pred_fallthru
      _
    // Predicated region
    $region10: #{tpu_custom_call.1} parent=1 // pred_check
      _
    $region11: #{tpu_custom_call.1} parent=1 // pred_check_branch
      %56 = sbr.rel (0) target = $region13
    $region12: #{tpu_custom_call.1} parent=1 // pred_region
      %s57 = sadd.s32 0, 0
      %s58 = sld [smem:[#allocation5]]
      %s59 = ssub.s32 %s58, 1
      %p60 = scmp.lt.s32.totalorder %s57, %s59
      %s61 = scalar_select %p60, %s57, %s59
      %s62 = sld [smem:[#allocation4 + %s61]]
      %s63 = smul.u32 2, %s62
      %p64 = scmp.lt.s32.totalorder %s63, 1
      %s65 = scalar_select %p64, %s63, 1
      %s66 = smul.addr %s65, 8
      %s67 = scalar_lea.vmem %s4, %s66
      %s68 = sadd.s32 0, 0
      %s69 = sld [smem:[#allocation5]]
      %s70 = ssub.s32 %s69, 1
      %p71 = scmp.lt.s32.totalorder %s68, %s70
      %s72 = scalar_select %p71, %s68, %s70
      %s73 = sld [smem:[#allocation4 + %s72]]
      %s74 = smul.u32 2, %s73
    $region13: #{tpu_custom_call.1} parent=1 // pred_fallthru
      _
    // Predicated region
    $region14: #{tpu_custom_call.1} parent=1 // pred_check
      _
    $region15: #{tpu_custom_call.1} parent=1 // pred_check_branch
      %76 = sbr.rel (0) target = $region17
    $region16: #{tpu_custom_call.1} parent=1 // pred_region
      %77 = dma.done [#allocation7], 256
    $region17: #{tpu_custom_call.1} parent=1 // pred_fallthru
      _
    %s78 = sadd.s32 0, 0
    %s79 = sld [smem:[#allocation5]]
    %s80 = ssub.s32 %s79, 1
    %p81 = scmp.lt.s32.totalorder %s78, %s80
    %s82 = scalar_select %p81, %s78, %s80
    %s83 = sld [smem:[#allocation4 + %s82]]
    %s84 = smul.u32 2, %s83
    %p85 = scmp.lt.s32.totalorder %s84, 1
    %s86 = scalar_select %p85, %s84, 1
    %s87 = smul.addr %s86, 8
    %s88 = scalar_lea.vmem %s2, %s87
    %s89 = sadd.s32 0, 0
    %s90 = sld [smem:[#allocation5]]
    %s91 = ssub.s32 %s90, 1
    %p92 = scmp.lt.s32.totalorder %s89, %s91
    %s93 = scalar_select %p92, %s89, %s91
    %s94 = sld [smem:[#allocation4 + %s93]]
    %s95 = smul.u32 2, %s94
    %p96 = scmp.lt.s32.totalorder %s95, 1
    %s97 = scalar_select %p96, %s95, 1
    %s98 = smul.addr %s97, 8
    %s99 = scalar_lea.vmem %s4, %s98
    %s100 = sadd.s32 0, 0
    %s101 = sld [smem:[#allocation5]]
    %s102 = ssub.s32 %s101, 1
    %p103 = scmp.lt.s32.totalorder %s100, %s102
    %s104 = scalar_select %p103, %s100, %s102
    %s105 = sld [smem:[#allocation4 + %s104]]
    %s106 = smul.u32 2, %s105
    %p107 = scmp.lt.s32.totalorder %s106, 1
    %s108 = scalar_select %p107, %s106, 1
    %s109 = smul.addr %s108, 8
    %s110 = scalar_lea.vmem %s2, %s109
    %s111 = sadd.s32 0, 0
    %s112 = sld [smem:[#allocation5]]
    %s113 = ssub.s32 %s112, 1
    %p114 = scmp.lt.s32.totalorder %s111, %s113
    %s115 = scalar_select %p114, %s111, %s113
    %s116 = sld [smem:[#allocation4 + %s115]]
    %s117 = smul.u32 2, %s116
    %s118 = sadd.s32 0, 0
    %s119 = sld [smem:[#allocation5]]
    %s120 = ssub.s32 %s119, 1
    %p121 = scmp.lt.s32.totalorder %s118, %s120
    %s122 = scalar_select %p121, %s118, %s120
    %s123 = sld [smem:[#allocation4 + %s122]]
    %s124 = smul.u32 2, %s123
    %s125 = sadd.s32 0, 0
    %s126 = sld [smem:[#allocation5]]
    %s127 = ssub.s32 %s126, 1
    %p128 = scmp.lt.s32.totalorder %s125, %s127
    %s129 = scalar_select %p128, %s125, %s127
    %s130 = sld [smem:[#allocation4 + %s129]]
    %s131 = smul.u32 2, %s130
    %p132 = scmp.lt.s32.totalorder %s131, 1
    %s133 = scalar_select %p132, %s131, 1
    %s134 = smul.addr %s133, 8
    %s135 = scalar_lea.vmem %s4, %s134
    %s136 = sadd.s32 0, 0
    %s137 = sld [smem:[#allocation5]]
    %s138 = ssub.s32 %s137, 1
    %p139 = scmp.lt.s32.totalorder %s136, %s138
    %s140 = scalar_select %p139, %s136, %s138
    %s141 = sld [smem:[#allocation4 + %s140]]
    %s142 = smul.u32 2, %s141
    %p143 = scmp.eq.s32.totalorder 0, 0
    // Predicated region
    $region18: #{tpu_custom_call.1} parent=1 // pred_check
      %p144 = pneg %p143
    $region19: #{tpu_custom_call.1} parent=1 // pred_check_branch
      %146 = sbr.rel (%p144) target = $region21
    $region20: #{tpu_custom_call.1} parent=1 // pred_region
      %vm147 = vcmask 261120
      %148 = vst.msk [vmem:[#allocation2] sm:$0xff] %vm147, 0.0
    $region21: #{tpu_custom_call.1} parent=1 // pred_fallthru
      _
    %s149 = sadd.s32 0, 0
    %s150 = sld [smem:[#allocation5]]
    %p151 = scmp.lt.s32.totalorder %s149, %s150
    // Predicated region
    $region22: #{tpu_custom_call.1} parent=1 // pred_check
      %p152 = pneg %p151
    $region23: #{tpu_custom_call.1} parent=1 // pred_check_branch
      %154 = sbr.rel (%p152) target = $region25
    $region24: #{tpu_custom_call.1} parent=1 // pred_region
      %v155 = vld [vmem:[#allocation6] sm:$0xff]
      %v156 = vld [vmem:[#allocation6 + $0x8] sm:$0xff]
      %v157 = vld [vmem:[%s110] sm:$0xff]
      %v158 = vld [vmem:[%s110 + $0x8] sm:$0xff]
      %v159 = vmul.f32 %v155, %v157
      %v160 = vmul.f32 %v156, %v158
      %v161 = vmul.f32 %v159, 0.5
      %v162 = vmul.f32 %v160, 0.5
      %v163 = vtanh.pop %v161
      %v164 = vtanh.pop %v162
      %v165 = vmul.f32 %v163, 0.5
      %v166 = vmul.f32 %v164, 0.5
      %v167 = vadd.f32 %v165, 0.5
      %v168 = vadd.f32 %v166, 0.5
      %v169 = vadd.f32 %v167, 1e-12
      %v170 = vadd.f32 %v168, 1e-12
      %v171 = vlog2.pop %v169
      %v172 = vmul.f32 %v171, 0.6931472
      %v173 = vlog2.pop %v170
      %v174 = vmul.f32 %v173, 0.6931472
      %v175 = vsub.f32 0.0, %v172
      %v176 = vsub.f32 0.0, %v174
      %v177 = vld [vmem:[%s135] sm:$0xff]
      %v178 = vld [vmem:[%s135 + $0x8] sm:$0xff]
      %vm179 = vcmp.gt.f32.partialorder %v177, 0.5
      %vm180 = vcmp.gt.f32.partialorder %v178, 0.5
      %v181 = vsel %vm179, 1, 0
      %v182 = vsel %vm180, 1, 0
      %183 = vset.pattern.permute.xlu0 0
      %184 = vperm.xlu0 %183, %v181
      %v185 = vpop.permute.xlu0 %184
      %186 = vset.pattern.permute.xlu0 0
      %187 = vperm.xlu0 %186, %v182
      %v188 = vpop.permute.xlu0 %187
      %vm189 = vcmp.eq.s32.totalorder %v185, 1
      %vm190 = vcmp.eq.s32.totalorder %v188, 1
      %v191 = vsel %vm189, %v175, 0.0
      %v192 = vsel %vm190, %v176, 0.0
      %v193 = vld [vmem:[#allocation2] sm:$0xff]
      %vm194 = vcmask 261120
      %v195 = vsel %vm194, %v191, 0.0
      %v196 = vsel %vm194, %v192, 0.0
      %v197 = vadd.f32 %v195, %v196
      %v198 = vadd.f32 %v193, %v197
      %199 = vst.msk [vmem:[#allocation2] sm:$0xff] %vm194, %v198
    $region25: #{tpu_custom_call.1} parent=1 // pred_fallthru
      _
    // Predicated region
    $region26: #{tpu_custom_call.1} parent=1 // pred_check
      %p200 = pneg %p143
    $region27: #{tpu_custom_call.1} parent=1 // pred_check_branch
      %202 = sbr.rel (%p200) target = $region29
    $region28: #{tpu_custom_call.1} parent=1 // pred_region
      %v203 = vld [vmem:[#allocation2] sm:$0xff]
      %vm204 = vcmask 261120
      %v205 = vsel %vm204, %v203, 0.0
      %206 = vadd.xlane.f32.xlu0 %v205
      %v207 = vpop.xlane.xlu0 %206
      %v208 = vrot.slane %v207, 4
      %v209 = vadd.f32 %v207, %v208
      %v210 = vrot.slane %v209, 2
      %v211 = vadd.f32 %v209, %v210
      %v212 = vrot.slane %v211, 1
      %v213 = vadd.f32 %v211, %v212
      %s214 = vtos %v213
      %v215 = vstv %s214
      %v216 = vadd.f32 %v215, 0.0
      %217 = vst [vmem:[#allocation9] sm:$0xff] %v216
    $region29: #{tpu_custom_call.1} parent=1 // pred_fallthru
      _
    // Predicated region
    $region30: #{tpu_custom_call.1} parent=1 // pred_check
      _
    $region31: #{tpu_custom_call.1} parent=1 // pred_check_branch
      %219 = sbr.rel (0) target = $region33
    $region32: #{tpu_custom_call.1} parent=1 // pred_region
      %s221 = ssub.s32 128, 128
      %222 = vsyncadd [#allocation8], %s221
      %s224 = sshll.u32 [#allocation9], 4
      %s225 = int_to_ptr.vmem [resolvable:$true] %s224
      %227 = dma.vmem_to_hbm [thread:$0]  %s225, 128, %s5, [#allocation8]
    $region33: #{tpu_custom_call.1} parent=1 // pred_fallthru
      _
    // Predicated region
    $region34: #{tpu_custom_call.1} parent=1 // pred_check
      _
    $region35: #{tpu_custom_call.1} parent=1 // pred_check_branch
      %229 = sbr.rel (0) target = $region37
    $region36: #{tpu_custom_call.1} parent=1 // pred_region
      %230 = dma.done [#allocation8], 128
    $region37: #{tpu_custom_call.1} parent=1 // pred_fallthru
      _
    %231 = vsyncpa [#allocation7], 1
    %232 = vsyncpa [#allocation8], 1

</llo_original>
